<compile_context>
chip_gen: v7x
topology: tpu7x:2x2x1
jax: 0.10.0
libtpu: 0.0.40
codegen_flags: <defaults>
</compile_context>

<pallas_src>
import functools

import jax
import jax.numpy as jnp
from jax.experimental import pallas as pl
from jax.experimental.pallas import tpu as pltpu


def _round_up(x, m):
    return ((x + m - 1) // m) * m


def _vmem_capacity_bytes():
    """Physical VMEM of the current TPU generation (conservative fallback)."""
    try:
        info = pltpu.get_tpu_info()
        cap = int(getattr(info, "vmem_capacity_bytes"))
        if cap > 0:
            return cap
    except Exception:
        pass
    return 64 * 1024 * 1024  # v7x per-TensorCore size; safe lower bound everywhere


def gated_fusion_kernel(x_ref, y_ref, wx_ref, wy_ref, b_ref, o_ref, *, blend_in_f32):
    x = x_ref[...]
    y = y_ref[...]
    # Two K=H MXU pushes accumulating in f32 replace concat + one K=2H push:
    # no (tile_n, 2H) VMEM temporary, no copy traffic before the MXU.
    z = jnp.dot(x, wx_ref[...], preferred_element_type=jnp.float32)
    z = z + jnp.dot(y, wy_ref[...], preferred_element_type=jnp.float32)
    gate = jax.nn.sigmoid(z + b_ref[...])                       # f32, EUP path
    if blend_in_f32:
        xb = x.astype(jnp.float32)
        yb = y.astype(jnp.float32)
        gb = gate
    else:
        # bf16 blend: 2 elem/lane on v6e/v7x VALU, fewer f32 temporaries.
        xb = x
        yb = y
        gb = gate.astype(x.dtype)
    # y + gate*(x - y)  ==  gate*x + (1 - gate)*y, one fewer VALU op.
    o_ref[...] = (yb + gb * (xb - yb)).astype(o_ref.dtype)


def prepare_gated_fusion_params(weight, bias, dtype=None):
    """One-time weight prep (hoist out of the hot path).

    weight: torch-style (H, 2H) Linear weight; bias: (H,).
    Returns (wx, wy, b):
      wx, wy: (H, H) contraction-major halves, cast to `dtype` so bf16
              activations hit the bf16 MXU path without promotion.
      b:      (1, H) f32 bias (added to the f32 accumulator).
    """
    H = bias.shape[0]
    wx = weight[:, :H].T
    wy = weight[:, H:].T
    if dtype is not None:
        wx = wx.astype(dtype)
        wy = wy.astype(dtype)
    b = bias.reshape(1, H).astype(jnp.float32)
    return wx, wy, b


def _choose_tile_n(N, H, itemsize, resident_bytes, vmem_budget):
    """Row tile: VMEM-budgeted, 128-aligned, >= 4 grid steps when possible."""
    # Per row: x, y, out streams double-buffered, plus ~4 f32 row-wide
    # intermediates (z/gate, x - y, blend temporaries) per kernel invocation.
    per_row = 2 * 3 * H * itemsize + 4 * H * 4
    avail = max(vmem_budget - resident_bytes, 16 * per_row)
    tile = int(avail // per_row)
    if tile >= 128:
        tile = (tile // 128) * 128          # fine on v5e (4x128 MXU) and v6e/v7x
    else:
        tile = max(8, (tile // 8) * 8)      # (8, 128) sublane minimum
    tile = min(tile, 1024)                  # diminishing returns past ~1K rows
    tile = min(tile, _round_up(N, 8))
    # >= 4 grid steps (2 per v7x TensorCore) so "parallel" sharding still gets
    # DMA/compute overlap inside each core.
    while tile > 8 and pl.cdiv(N, tile) < 4:
        tile = max(8, ((tile // 2) // 8) * 8)
    return tile


def _const_block_spec(shape, single_buffer):
    index_map = lambda i: (0,) * len(shape)
    if single_buffer:
        try:
            # Constant index_map => block is never re-fetched; one buffer is
            # enough, halving the resident-weight VMEM footprint (v7x).
            return pl.BlockSpec(shape, index_map, pipeline_mode=pl.Buffered(1))
        except TypeError:
            pass  # older jax without pipeline_mode: fall back to default
    return pl.BlockSpec(shape, index_map)


def gated_fusion(x, y, weight=None, bias=None, *, tile_n=None, prepared=None,
                 single_buffer_weights=None):
    """GatedFusion forward.  x, y: (..., H); weight: (H, 2H); bias: (H,)."""
    orig_shape = x.shape
    H = orig_shape[-1]

    if prepared is None:
        prepared = prepare_gated_fusion_params(weight, bias, dtype=x.dtype)
    wx, wy, b = prepared
    # Keep matmul operands in the activation dtype (bf16 MXU path on v6e/v7x,
    # no silent promotion of a mixed-dtype dot).
    if wx.dtype != x.dtype:
        wx = wx.astype(x.dtype)
        wy = wy.astype(x.dtype)

    xf = x.reshape(-1, H)
    yf = y.reshape(-1, H)
    N = xf.shape[0]

    vmem_cap = _vmem_capacity_bytes()
    w_bytes = int(wx.size) * wx.dtype.itemsize + int(wy.size) * wy.dtype.itemsize
    b_bytes = int(b.size) * b.dtype.itemsize
    if single_buffer_weights is None:
        # Single-buffer the resident weights once double-buffering them would
        # eat a noticeable share of VMEM (matters mostly on v7x's 64 MiB).
        single_buffer_weights = 2 * (w_bytes + b_bytes) > vmem_cap // 8
    resident = (1 if single_buffer_weights else 2) * (w_bytes + b_bytes)

    if tile_n is None:
        tile_n = _choose_tile_n(N, H, xf.dtype.itemsize, resident,
                                vmem_budget=int(vmem_cap * 0.65))

    blend_in_f32 = (xf.dtype == jnp.float32)
    kernel = functools.partial(gated_fusion_kernel, blend_in_f32=blend_in_f32)

    # TODO(synk): if an xprof trace shows exposed DMA at small H (<=256), sweep
    # pipeline_mode=pl.Buffered(3) on the x/y/out specs.
    out = pl.pallas_call(
        kernel,
        out_shape=jax.ShapeDtypeStruct((N, H), x.dtype),
        grid_spec=pltpu.PrefetchScalarGridSpec(
            num_scalar_prefetch=0,
            grid=(pl.cdiv(N, tile_n),),
            in_specs=[
                pl.BlockSpec((tile_n, H), lambda i: (i, 0)),        # x rows
                pl.BlockSpec((tile_n, H), lambda i: (i, 0)),        # y rows
                _const_block_spec((H, H), single_buffer_weights),   # W_x (resident)
                _const_block_spec((H, H), single_buffer_weights),   # W_y (resident)
                _const_block_spec((1, H), single_buffer_weights),   # bias
            ],
            out_specs=pl.BlockSpec((tile_n, H), lambda i: (i, 0)),
        ),
        compiler_params=pltpu.CompilerParams(
            dimension_semantics=("parallel",),
            vmem_limit_bytes=int(vmem_cap * 0.75),
        ),
    )(xf, yf, wx, wy, b)

    return out.reshape(orig_shape)


def gated_fusion_ref(x, y, weight, bias):
    concat = jnp.concatenate([x, y], axis=-1)
    gate = jax.nn.sigmoid(concat @ weight.T + bias)
    return gate * x + (1.0 - gate) * y


if __name__ == "__main__":
    # Small, module-consistent shapes: batch=2, seq=8, hidden=32
    B, S, H = 2, 8, 32
    key = jax.random.PRNGKey(0)
    kx, ky, kw, kb = jax.random.split(key, 4)

    x = jax.random.normal(kx, (B, S, H), dtype=jnp.float32)
    y = jax.random.normal(ky, (B, S, H), dtype=jnp.float32)
    # Deterministic nn.Linear-style init: U(-1/sqrt(fan_in), 1/sqrt(fan_in))
    fan_in = 2 * H
    bound = 1.0 / (fan_in ** 0.5)
    weight = jax.random.uniform(kw, (H, 2 * H), minval=-bound, maxval=bound,
                                dtype=jnp.float32)
    bias = jax.random.uniform(kb, (H,), minval=-bound, maxval=bound,
                              dtype=jnp.float32)

    ref = gated_fusion_ref(x, y, weight, bias)

    # f32 path (weight prep hoisted out of the hot path).
    prepared = prepare_gated_fusion_params(weight, bias, dtype=jnp.float32)
    out = gated_fusion(x, y, prepared=prepared)
    out = jax.block_until_ready(out)
    assert out.shape == (B, S, H)
    assert jnp.allclose(out, ref, atol=1e-5, rtol=1e-5), "f32 mismatch vs reference"

    # bf16 path (bf16 MXU + bf16 blend on v6e/v7x); loose bf16 tolerance.
    xb = x.astype(jnp.bfloat16)
    yb = y.astype(jnp.bfloat16)
    out_bf16 = gated_fusion(xb, yb, weight, bias)
    out_bf16 = jax.block_until_ready(out_bf16)
    assert out_bf16.shape == (B, S, H)
    assert jnp.allclose(out_bf16.astype(jnp.float32), ref, atol=1e-1, rtol=1e-1), \
        "bf16 mismatch vs reference"

    print("KERNEL_OK")
</pallas_src>

<mosaic_0001>
module attributes {stable_mosaic.version = 11 : i64} {
  func.func @gated_fusion_kernel(%arg0: i32, %arg1: memref<8x32xf32, #tpu.memory_space<vmem>>, %arg2: memref<8x32xf32, #tpu.memory_space<vmem>>, %arg3: memref<32x32xf32, #tpu.memory_space<vmem>>, %arg4: memref<32x32xf32, #tpu.memory_space<vmem>>, %arg5: memref<1x32xf32, #tpu.memory_space<vmem>>, %arg6: memref<8x32xf32, #tpu.memory_space<vmem>>) attributes {dimension_semantics = [#tpu.dimension_semantics<parallel>], iteration_bounds = array<i64: 2>, scalar_prefetch = 0 : i64, scratch_operands = 0 : i64, tpu.core_type = #tpu.core_type<tc>, window_params = [{transform_indices = @transform_0, window_bounds = array<i64: 8, 32>}, {transform_indices = @transform_1, window_bounds = array<i64: 8, 32>}, {pipeline_mode = #tpu.pipeline_mode<synchronous>, transform_indices = @transform_2, window_bounds = array<i64: 32, 32>}, {pipeline_mode = #tpu.pipeline_mode<synchronous>, transform_indices = @transform_3, window_bounds = array<i64: 32, 32>}, {pipeline_mode = #tpu.pipeline_mode<synchronous>, transform_indices = @transform_4, window_bounds = array<i64: 1, 32>}, {transform_indices = @transform_5, window_bounds = array<i64: 8, 32>}]} {
    %c0 = arith.constant 0 : index
    %c0_0 = arith.constant 0 : index
    %0 = vector.load %arg1[%c0, %c0_0] : memref<8x32xf32, #tpu.memory_space<vmem>>, vector<8x32xf32>
    %c0_1 = arith.constant 0 : index
    %c0_2 = arith.constant 0 : index
    %1 = vector.load %arg2[%c0_1, %c0_2] : memref<8x32xf32, #tpu.memory_space<vmem>>, vector<8x32xf32>
    %c0_3 = arith.constant 0 : index
    %c0_4 = arith.constant 0 : index
    %2 = vector.load %arg3[%c0_3, %c0_4] : memref<32x32xf32, #tpu.memory_space<vmem>>, vector<32x32xf32>
    %cst = arith.constant dense<0.000000e+00> : vector<8x32xf32>
    %3 = tpu.matmul %0, %2, %cst {dimension_numbers = #tpu.dot_dimension_numbers<[1], [0], [0], [1], [0, 0, 1, 1], [], []>} : vector<8x32xf32>, vector<32x32xf32>, vector<8x32xf32> -> vector<8x32xf32>
    %c0_5 = arith.constant 0 : index
    %c0_6 = arith.constant 0 : index
    %4 = vector.load %arg4[%c0_5, %c0_6] : memref<32x32xf32, #tpu.memory_space<vmem>>, vector<32x32xf32>
    %cst_7 = arith.constant dense<0.000000e+00> : vector<8x32xf32>
    %5 = tpu.matmul %1, %4, %cst_7 {dimension_numbers = #tpu.dot_dimension_numbers<[1], [0], [0], [1], [0, 0, 1, 1], [], []>} : vector<8x32xf32>, vector<32x32xf32>, vector<8x32xf32> -> vector<8x32xf32>
    %6 = arith.addf %3, %5 : vector<8x32xf32>
    %c0_8 = arith.constant 0 : index
    %c0_9 = arith.constant 0 : index
    %7 = vector.load %arg5[%c0_8, %c0_9] : memref<1x32xf32, #tpu.memory_space<vmem>>, vector<1x32xf32>
    %8 = vector.broadcast %7 : vector<1x32xf32> to vector<8x32xf32>
    %9 = arith.addf %6, %8 : vector<8x32xf32>
    %10 = arith.negf %9 : vector<8x32xf32>
    %11 = math.exp %10 : vector<8x32xf32>
    %cst_10 = arith.constant 1.000000e+00 : f32
    %12 = vector.broadcast %cst_10 : f32 to vector<8x32xf32>
    %13 = arith.addf %12, %11 : vector<8x32xf32>
    %14 = arith.divf %12, %13 : vector<8x32xf32>
    %15 = arith.subf %0, %1 : vector<8x32xf32>
    %16 = arith.mulf %14, %15 : vector<8x32xf32>
    %17 = arith.addf %1, %16 : vector<8x32xf32>
    %c0_11 = arith.constant 0 : index
    %c0_12 = arith.constant 0 : index
    %18 = vector.load %arg6[%c0_11, %c0_12] : memref<8x32xf32, #tpu.memory_space<vmem>>, vector<8x32xf32>
    tpu.vector_store %arg6[%c0_11, %c0_12], %17 {strides = array<i32>} : memref<8x32xf32, #tpu.memory_space<vmem>>, vector<8x32xf32>,
    return
  }
  func.func @transform_0(%arg0: i32) -> (i32, i32) {
    %c0_i32 = arith.constant 0 : i32
    %c0_i32_0 = arith.constant 0 : i32
    return %arg0, %c0_i32 : i32, i32
  }
  func.func @transform_1(%arg0: i32) -> (i32, i32) {
    %c0_i32 = arith.constant 0 : i32
    %c0_i32_0 = arith.constant 0 : i32
    return %arg0, %c0_i32 : i32, i32
  }
  func.func @transform_2(%arg0: i32) -> (i32, i32) {
    %c0_i32 = arith.constant 0 : i32
    %c0_i32_0 = arith.constant 0 : i32
    %c0_i32_1 = arith.constant 0 : i32
    return %c0_i32, %c0_i32_0 : i32, i32
  }
  func.func @transform_3(%arg0: i32) -> (i32, i32) {
    %c0_i32 = arith.constant 0 : i32
    %c0_i32_0 = arith.constant 0 : i32
    %c0_i32_1 = arith.constant 0 : i32
    return %c0_i32, %c0_i32_0 : i32, i32
  }
  func.func @transform_4(%arg0: i32) -> (i32, i32) {
    %c0_i32 = arith.constant 0 : i32
    %c0_i32_0 = arith.constant 0 : i32
    %c0_i32_1 = arith.constant 0 : i32
    return %c0_i32, %c0_i32_0 : i32, i32
  }
  func.func @transform_5(%arg0: i32) -> (i32, i32) {
    %c0_i32 = arith.constant 0 : i32
    %c0_i32_0 = arith.constant 0 : i32
    return %arg0, %c0_i32 : i32, i32
  }
}

</mosaic_0001>

<llo_original>
// kernel: tpu_custom_call.1
$region0: #{tpu_custom_call.1}
  #allocation0 [shape = 'u32[]', space=smem, size = 0x4, offset = 0x4, fixed_abs, tag = 'smem constant byte address 0x4 - core index']
  #allocation1 [shape = 'u32[144,128]{1,0:T(1,128)}', space=vmem, size = 0x12000, scoped, tag = 'internal scratch']
  %s0 = inlined_call_operand.hbm [shape: f32[16,32], index: 0, kind: input, shape index: {}]
  %s1 = inlined_call_operand.hbm [shape: f32[16,32], index: 1, kind: input, shape index: {}]
  %s2 = inlined_call_operand.hbm [shape: f32[32,32], index: 2, kind: input, shape index: {}]
  %s3 = inlined_call_operand.hbm [shape: f32[32,32], index: 3, kind: input, shape index: {}]
  %s4 = inlined_call_operand.vmem [shape: f32[1,32], index: 4, kind: input, shape index: {}]
  %s5 = inlined_call_operand.hbm [shape: f32[16,32], index: 5, kind: output, shape index: {}]
  %s6 = sld [smem:[#allocation0]]
  $region69: #{tpu_custom_call.1} parent=0
    _
  %s8 = ssub.s32 1, %s6
  %s9 = scalar_select 0, %s8, %s6
  $region1: #{tpu_custom_call.1} parent=0
    #allocation2 [shape = 'u8[8192]{0}', space=vmem, size = 0x2000, scoped, tag = 'input window, operand 0']
    #allocation3 [shape = 's32[2]{0}', space=sflag, size = 0x8, scoped, tag = 'scoped memory for tpu_custom_call.1']
    #allocation4 [shape = 's32[2]{0}', space=sflag, size = 0x8, scoped, tag = 'scoped memory for tpu_custom_call.1']
    #allocation5 [shape = 'u8[8192]{0}', space=vmem, size = 0x2000, scoped, tag = 'input window, operand 1']
    #allocation6 [shape = 's32[2]{0}', space=sflag, size = 0x8, scoped, tag = 'scoped memory for tpu_custom_call.1']
    #allocation7 [shape = 'u8[16384]{0}', space=vmem, size = 0x4000, scoped, tag = 'input window, operand 2, single buffered']
    #allocation8 [shape = 'u8[16384]{0}', space=vmem, size = 0x4000, scoped, tag = 'input window, operand 3, single buffered']
    #allocation9 [shape = 's32[1]{0}', space=sflag, size = 0x4, scoped, tag = 'scoped memory for tpu_custom_call.1']
    #allocation10 [shape = 'u8[8192]{0}', space=vmem, size = 0x2000, scoped, tag = 'output window, operand 0']
    %10 = vsyncpa [#allocation3], 0
    %s11 = scalar_lea.sflag [#allocation3], 1
    %12 = vsyncpa %s11, 0
    %13 = vsyncpa [#allocation6], 0
    %s14 = scalar_lea.sflag [#allocation6], 1
    %15 = vsyncpa %s14, 0
    %16 = vsyncpa [#allocation9], 0
    %17 = vsyncpa [#allocation4], 0
    %s18 = scalar_lea.sflag [#allocation4], 1
    %19 = vsyncpa %s18, 0
    loop: start=0, step=1, limit=4
    $region2: #{tpu_custom_call.1} parent=1 // loop_pre_header
      _
    $region3: #{tpu_custom_call.1} parent=1 // loop_header
      %s21 = sphi 0, %s25
      %p22 = scmp.ge.s32.totalorder %s21, 4
      %s31 = sphi 0, %s33
      %s34 = sphi 0, %s31
      %s35 = sphi 0, %s34
      %s51 = sphi 0, %s35
      %s57 = sphi 0, %s59
      %s60 = sphi 0, %s57
      %s61 = sphi 0, %s60
      %s77 = sphi 0, %s61
      %s81 = sphi 0, %s81
      %s83 = sphi 0, %s81
      %s84 = sphi 0, %s83
      %s98 = sphi 0, %s84
      %s102 = sphi 0, %s102
      %s104 = sphi 0, %s102
      %s105 = sphi 0, %s104
      %s119 = sphi 0, %s105
      %s123 = sphi 0, %s123
      %s125 = sphi 0, %s123
      %s126 = sphi 0, %s125
      %s140 = sphi 0, %s126
      %s146 = sphi 0, %s148
      %s149 = sphi 0, %s146
      %s150 = sphi 0, %s149
      %s166 = sphi 0, %s150
    $region4: #{tpu_custom_call.1} parent=1 // loop_header_branch
      %24 = sbr.rel (%p22) target = $region8
    $region5: #{tpu_custom_call.1} parent=1 // loop_body
      %s26 = ssub.s32 %s21, 1
      %s27 = ssub.s32 %s21, 2
      %s28 = sadd.s32 %s21, 1
      %s29 = ssub.s32 %s21, %s28
      %p30 = scmp.eq.s32.totalorder %s29, 0
      %s32 = sadd.s32 %s31, 1
      %s33 = scalar_select %p30, %s31, %s32
      %p36 = pneg %p30
      %p37 = scmp.eq.s32.totalorder %s21, 1
      %p38 = por %p36, %p37
      %p39 = scmp.ne.s32.totalorder %s31, %s34
      %p40 = scmp.eq.s32.totalorder %s21, 0
      %p41 = por %p39, %p40
      %p42 = scmp.ne.s32.totalorder %s31, %s34
      %p43 = scmp.eq.s32.totalorder %s26, 1
      %p44 = por %p42, %p43
      %p45 = scmp.ne.s32.totalorder %s34, %s35
      %p46 = scmp.eq.s32.totalorder %s26, 0
      %p47 = por %p45, %p46
      %p48 = scmp.ne.s32.totalorder %s34, %s35
      %p49 = scmp.eq.s32.totalorder %s27, 1
      %p50 = por %p48, %p49
      %p52 = scmp.ne.s32.totalorder %s35, %s51
      %p53 = scmp.eq.s32.totalorder %s27, 0
      %p54 = por %p52, %p53
      %s55 = ssub.s32 %s21, %s28
      %p56 = scmp.eq.s32.totalorder %s55, 0
      %s58 = sadd.s32 %s57, 1
      %s59 = scalar_select %p56, %s57, %s58
      %p62 = pneg %p56
      %p63 = scmp.eq.s32.totalorder %s21, 1
      %p64 = por %p62, %p63
      %p65 = scmp.ne.s32.totalorder %s57, %s60
      %p66 = scmp.eq.s32.totalorder %s21, 0
      %p67 = por %p65, %p66
      %p68 = scmp.ne.s32.totalorder %s57, %s60
      %p69 = scmp.eq.s32.totalorder %s26, 1
      %p70 = por %p68, %p69
      %p71 = scmp.ne.s32.totalorder %s60, %s61
      %p72 = scmp.eq.s32.totalorder %s26, 0
      %p73 = por %p71, %p72
      %p74 = scmp.ne.s32.totalorder %s60, %s61
      %p75 = scmp.eq.s32.totalorder %s27, 1
      %p76 = por %p74, %p75
      %p78 = scmp.ne.s32.totalorder %s61, %s77
      %p79 = scmp.eq.s32.totalorder %s27, 0
      %p80 = por %p78, %p79
      %s82 = sadd.s32 %s81, 1
      %p85 = scmp.eq.s32.totalorder %s21, 1
      %p86 = scmp.ne.s32.totalorder %s81, %s83
      %p87 = scmp.eq.s32.totalorder %s21, 0
      %p88 = por %p86, %p87
      %p89 = scmp.ne.s32.totalorder %s81, %s83
      %p90 = scmp.eq.s32.totalorder %s26, 1
      %p91 = por %p89, %p90
      %p92 = scmp.ne.s32.totalorder %s83, %s84
      %p93 = scmp.eq.s32.totalorder %s26, 0
      %p94 = por %p92, %p93
      %p95 = scmp.ne.s32.totalorder %s83, %s84
      %p96 = scmp.eq.s32.totalorder %s27, 1
      %p97 = por %p95, %p96
      %p99 = scmp.ne.s32.totalorder %s84, %s98
      %p100 = scmp.eq.s32.totalorder %s27, 0
      %p101 = por %p99, %p100
      %s103 = sadd.s32 %s102, 1
      %p106 = scmp.eq.s32.totalorder %s21, 1
      %p107 = scmp.ne.s32.totalorder %s102, %s104
      %p108 = scmp.eq.s32.totalorder %s21, 0
      %p109 = por %p107, %p108
      %p110 = scmp.ne.s32.totalorder %s102, %s104
      %p111 = scmp.eq.s32.totalorder %s26, 1
      %p112 = por %p110, %p111
      %p113 = scmp.ne.s32.totalorder %s104, %s105
      %p114 = scmp.eq.s32.totalorder %s26, 0
      %p115 = por %p113, %p114
      %p116 = scmp.ne.s32.totalorder %s104, %s105
      %p117 = scmp.eq.s32.totalorder %s27, 1
      %p118 = por %p116, %p117
      %p120 = scmp.ne.s32.totalorder %s105, %s119
      %p121 = scmp.eq.s32.totalorder %s27, 0
      %p122 = por %p120, %p121
      %s124 = sadd.s32 %s123, 1
      %p127 = scmp.eq.s32.totalorder %s21, 1
      %p128 = scmp.ne.s32.totalorder %s123, %s125
      %p129 = scmp.eq.s32.totalorder %s21, 0
      %p130 = por %p128, %p129
      %p131 = scmp.ne.s32.totalorder %s123, %s125
      %p132 = scmp.eq.s32.totalorder %s26, 1
      %p133 = por %p131, %p132
      %p134 = scmp.ne.s32.totalorder %s125, %s126
      %p135 = scmp.eq.s32.totalorder %s26, 0
      %p136 = por %p134, %p135
      %p137 = scmp.ne.s32.totalorder %s125, %s126
      %p138 = scmp.eq.s32.totalorder %s27, 1
      %p139 = por %p137, %p138
      %p141 = scmp.ne.s32.totalorder %s126, %s140
      %p142 = scmp.eq.s32.totalorder %s27, 0
      %p143 = por %p141, %p142
      %s144 = ssub.s32 %s21, %s28
      %p145 = scmp.eq.s32.totalorder %s144, 0
      %s147 = sadd.s32 %s146, 1
      %s148 = scalar_select %p145, %s146, %s147
      %p151 = pneg %p145
      %p152 = scmp.eq.s32.totalorder %s21, 1
      %p153 = por %p151, %p152
      %p154 = scmp.ne.s32.totalorder %s146, %s149
      %p155 = scmp.eq.s32.totalorder %s21, 0
      %p156 = por %p154, %p155
      %p157 = scmp.ne.s32.totalorder %s146, %s149
      %p158 = scmp.eq.s32.totalorder %s26, 1
      %p159 = por %p157, %p158
      %p160 = scmp.ne.s32.totalorder %s149, %s150
      %p161 = scmp.eq.s32.totalorder %s26, 0
      %p162 = por %p160, %p161
      %p163 = scmp.ne.s32.totalorder %s149, %s150
      %p164 = scmp.eq.s32.totalorder %s27, 1
      %p165 = por %p163, %p164
      %p167 = scmp.ne.s32.totalorder %s150, %s166
      %p168 = scmp.eq.s32.totalorder %s27, 0
      %p169 = por %p167, %p168
      %p170 = scmp.le.s32.totalorder 1, %s21
      %p171 = scmp.lt.s32.totalorder %s21, 3
      %p172 = pnand %p170, %p171
      %p173 = pneg %p172
      // Predicated region
      $region9: #{tpu_custom_call.1} parent=5 // pred_check
        _
      $region10: #{tpu_custom_call.1} parent=5 // pred_check_branch
        %175 = sbr.rel (%p172) target = $region12
      $region11: #{tpu_custom_call.1} parent=5 // pred_region
        %s176 = ssub.s32 %s21, 1
        // Predicated region
        $region13: #{tpu_custom_call.1} parent=11 // pred_check
          %p177 = pneg %p94
        $region14: #{tpu_custom_call.1} parent=11 // pred_check_branch
          %179 = sbr.rel (%p177) target = $region16
        $region15: #{tpu_custom_call.1} parent=11 // pred_region
          %s181 = ssub.s32 512, 512
          %182 = vsyncadd [#allocation6], %s181
          %s183 = sshll.u32 [#allocation7], 4
          %s184 = int_to_ptr.vmem [resolvable:$true] %s183
          %189 = dma.hbm_to_vmem [thread:$0]  %s2, 512, %s184, [#allocation6], 128, 128, 8
        $region16: #{tpu_custom_call.1} parent=11 // pred_fallthru
          _
        // Predicated region
        $region17: #{tpu_custom_call.1} parent=11 // pred_check
          %p190 = pneg %p115
        $region18: #{tpu_custom_call.1} parent=11 // pred_check_branch
          %192 = sbr.rel (%p190) target = $region20
        $region19: #{tpu_custom_call.1} parent=11 // pred_region
          %s194 = ssub.s32 512, 512
          %195 = vsyncadd [#allocation9], %s194
          %s196 = sshll.u32 [#allocation8], 4
          %s197 = int_to_ptr.vmem [resolvable:$true] %s196
          %202 = dma.hbm_to_vmem [thread:$0]  %s3, 512, %s197, [#allocation9], 128, 128, 8
        $region20: #{tpu_custom_call.1} parent=11 // pred_fallthru
          _
        // Predicated region
        $region21: #{tpu_custom_call.1} parent=11 // pred_check
          %p203 = pneg %p136
        $region22: #{tpu_custom_call.1} parent=11 // pred_check_branch
          %205 = sbr.rel (%p203) target = $region24
        $region23: #{tpu_custom_call.1} parent=11 // pred_region
          _
        $region24: #{tpu_custom_call.1} parent=11 // pred_fallthru
          _
      $region12: #{tpu_custom_call.1} parent=5 // pred_fallthru
        _
      %p206 = scmp.lt.s32.totalorder %s21, 2
      // Predicated region
      $region25: #{tpu_custom_call.1} parent=5 // pred_check
        %p207 = pneg %p206
      $region26: #{tpu_custom_call.1} parent=5 // pred_check_branch
        %209 = sbr.rel (%p207) target = $region28
      $region27: #{tpu_custom_call.1} parent=5 // pred_region
        // Predicated region
        $region29: #{tpu_custom_call.1} parent=27 // pred_check
          %p210 = pneg %p41
        $region30: #{tpu_custom_call.1} parent=27 // pred_check_branch
          %212 = sbr.rel (%p210) target = $region32
        $region31: #{tpu_custom_call.1} parent=27 // pred_region
          %s213 = sand.u32 %s31, 1
          %s214 = scalar_lea.sflag [#allocation3], %s213
          %s215 = sand.u32 %s31, 1
          %s216 = smul.addr %s215, 8
          %s217 = scalar_lea.vmem [#allocation2], %s216
          %s219 = ssub.s32 128, 128
          %220 = vsyncadd %s214, %s219
          %s221 = smul.addr %s21, 128
          %s222 = scalar_lea.hbm %s0, %s221
          %s224 = sshll.u32 %s217, 4
          %s225 = int_to_ptr.vmem [resolvable:$true] %s224
          %227 = dma.hbm_to_vmem [thread:$0]  %s222, 128, %s225, %s214
        $region32: #{tpu_custom_call.1} parent=27 // pred_fallthru
          _
        // Predicated region
        $region33: #{tpu_custom_call.1} parent=27 // pred_check
          %p228 = pneg %p67
        $region34: #{tpu_custom_call.1} parent=27 // pred_check_branch
          %230 = sbr.rel (%p228) target = $region36
        $region35: #{tpu_custom_call.1} parent=27 // pred_region
          %s231 = sand.u32 %s21, 1
          %s232 = scalar_lea.sflag [#allocation6], %s231
          %s233 = sand.u32 %s57, 1
          %s234 = smul.addr %s233, 8
          %s235 = scalar_lea.vmem [#allocation5], %s234
          %s237 = ssub.s32 128, 128
          %238 = vsyncadd %s232, %s237
          %s239 = smul.addr %s21, 128
          %s240 = scalar_lea.hbm %s1, %s239
          %s242 = sshll.u32 %s235, 4
          %s243 = int_to_ptr.vmem [resolvable:$true] %s242
          %245 = dma.hbm_to_vmem [thread:$0]  %s240, 128, %s243, %s232
        $region36: #{tpu_custom_call.1} parent=27 // pred_fallthru
          _
      $region28: #{tpu_custom_call.1} parent=5 // pred_fallthru
        _
      %p246 = scmp.le.s32.totalorder 1, %s21
      %p247 = scmp.lt.s32.totalorder %s21, 3
      %p248 = pnand %p246, %p247
      %p249 = pneg %p248
      // Predicated region
      $region37: #{tpu_custom_call.1} parent=5 // pred_check
        _
      $region38: #{tpu_custom_call.1} parent=5 // pred_check_branch
        %251 = sbr.rel (%p248) target = $region40
      $region39: #{tpu_custom_call.1} parent=5 // pred_region
        %s252 = ssub.s32 %s21, 1
        %s253 = sand.u32 %s34, 1
        %s254 = scalar_lea.sflag [#allocation3], %s253
        %s255 = sand.u32 %s34, 1
        %s256 = smul.addr %s255, 8
        %s257 = scalar_lea.vmem [#allocation2], %s256
        // Predicated region
        $region41: #{tpu_custom_call.1} parent=39 // pred_check
          %p258 = pneg %p47
        $region42: #{tpu_custom_call.1} parent=39 // pred_check_branch
          %260 = sbr.rel (%p258) target = $region44
        $region43: #{tpu_custom_call.1} parent=39 // pred_region
          %261 = dma.done %s254, 128
        $region44: #{tpu_custom_call.1} parent=39 // pred_fallthru
          _
        %s262 = sand.u32 %s26, 1
        %s263 = scalar_lea.sflag [#allocation6], %s262
        %s264 = sand.u32 %s60, 1
        %s265 = smul.addr %s264, 8
        %s266 = scalar_lea.vmem [#allocation5], %s265
        // Predicated region
        $region45: #{tpu_custom_call.1} parent=39 // pred_check
          %p267 = pneg %p73
        $region46: #{tpu_custom_call.1} parent=39 // pred_check_branch
          %269 = sbr.rel (%p267) target = $region48
        $region47: #{tpu_custom_call.1} parent=39 // pred_region
          %270 = dma.done %s263, 128
        $region48: #{tpu_custom_call.1} parent=39 // pred_fallthru
          _
        // Predicated region
        $region49: #{tpu_custom_call.1} parent=39 // pred_check
          %p271 = pneg %p94
        $region50: #{tpu_custom_call.1} parent=39 // pred_check_branch
          %273 = sbr.rel (%p271) target = $region52
        $region51: #{tpu_custom_call.1} parent=39 // pred_region
          %274 = dma.done [#allocation6], 512
        $region52: #{tpu_custom_call.1} parent=39 // pred_fallthru
          _
        // Predicated region
        $region53: #{tpu_custom_call.1} parent=39 // pred_check
          %p275 = pneg %p115
        $region54: #{tpu_custom_call.1} parent=39 // pred_check_branch
          %277 = sbr.rel (%p275) target = $region56
        $region55: #{tpu_custom_call.1} parent=39 // pred_region
          %278 = dma.done [#allocation9], 512
        $region56: #{tpu_custom_call.1} parent=39 // pred_fallthru
          _
        %s279 = sand.u32 %s34, 1
        %s280 = scalar_lea.sflag [#allocation3], %s279
        %s281 = sand.u32 %s34, 1
        %s282 = smul.addr %s281, 8
        %s283 = scalar_lea.vmem [#allocation2], %s282
        %p284 = pneg %p47
        %p285 = pneg %p44
        %s286 = sand.u32 %s26, 1
        %s287 = scalar_lea.sflag [#allocation6], %s286
        %s288 = sand.u32 %s60, 1
        %s289 = smul.addr %s288, 8
        %s290 = scalar_lea.vmem [#allocation5], %s289
        %p291 = pneg %p73
        %p292 = pneg %p70
        %p293 = pneg %p94
        %p294 = pneg %p91
        %p295 = pneg %p115
        %p296 = pneg %p112
        %p297 = pneg %p136
        %p298 = pneg %p133
        %p299 = pneg %p162
        %p300 = pneg %p159
        %s301 = sand.u32 %s149, 1
        %s302 = scalar_lea.sflag [#allocation4], %s301
        %s303 = sand.u32 %s149, 1
        %s304 = smul.addr %s303, 8
        %s305 = scalar_lea.vmem [#allocation10], %s304
        %v306 = vld [vmem:[%s257] sm:$0xff]
        %v307 = vld [vmem:[%s266] sm:$0xff]
        %v308 = vld [vmem:[#allocation7] sm:$0xff]
        %v309 = vld [vmem:[#allocation7 + $0x8] sm:$0xff]
        %v310 = vld [vmem:[#allocation7 + $0x10] sm:$0xff]
        %v311 = vld [vmem:[#allocation7 + $0x18] sm:$0xff]
        %v312 = vld [vmem:[#allocation8] sm:$0xff]
        %v313 = vld [vmem:[#allocation8 + $0x8] sm:$0xff]
        %v314 = vld [vmem:[#allocation8 + $0x10] sm:$0xff]
        %v315 = vld [vmem:[#allocation8 + $0x18] sm:$0xff]
        %vm316 = vcmask 261120
        %v318 = vsel %vm316, %v307, 0
        %320 = vmatprep.subr.mxu0 0.0
        %321 = vmatpush1.msra.mxu0 %v312
        %322 = vmatprep.subr.mxu0 0.0
        %323 = vmatpush1.msra.mxu0 %v313
        %324 = vmatprep.subr.mxu0 0.0
        %325 = vmatpush1.msra.mxu0 %v314
        %326 = vmatprep.subr.mxu0 0.0
        %327 = vmatpush1.msra.mxu0 %v315
        %328 = vmatprep.subr.mxu0 0.0
        %329 = vmatpush1.msra.mxu0 0.0
        %330 = vmatprep.subr.mxu0 0.0
        %331 = vmatpush1.msra.mxu0 0.0
        %332 = vmatprep.subr.mxu0 0.0
        %333 = vmatpush1.msra.mxu0 0.0
        %334 = vmatprep.subr.mxu0 0.0
        %335 = vmatpush1.msra.mxu0 0.0
        %336 = vmatprep.subr.mxu0 0.0
        %337 = vmatpush1.msra.mxu0 0.0
        %338 = vmatprep.subr.mxu0 0.0
        %339 = vmatpush1.msra.mxu0 0.0
        %340 = vmatprep.subr.mxu0 0.0
        %341 = vmatpush1.msra.mxu0 0.0
        %342 = vmatprep.subr.mxu0 0.0
        %343 = vmatpush1.msra.mxu0 0.0
        %344 = vmatprep.subr.mxu0 0.0
        %345 = vmatpush1.msra.mxu0 0.0
        %346 = vmatprep.subr.mxu0 0.0
        %347 = vmatpush1.msra.mxu0 0.0
        %348 = vmatprep.subr.mxu0 0.0
        %349 = vmatpush1.msra.mxu0 0.0
        %350 = vmatprep.subr.mxu0 0.0
        %351 = vmatpush1.msra.mxu0 0.0
        %352 = vmatprep.subr.mxu0 0.0
        %353 = vmatpush1.msra.mxu0 0.0
        %354 = vmatprep.subr.mxu0 0.0
        %355 = vmatpush1.msra.mxu0 0.0
        %356 = vmatprep.subr.mxu0 0.0
        %357 = vmatpush1.msra.mxu0 0.0
        %358 = vmatprep.subr.mxu0 0.0
        %359 = vmatpush1.msra.mxu0 0.0
        %360 = vmatprep.subr.mxu0 0.0
        %361 = vmatpush1.msra.mxu0 0.0
        %362 = vmatprep.subr.mxu0 0.0
        %363 = vmatpush1.msra.mxu0 0.0
        %364 = vmatprep.subr.mxu0 0.0
        %365 = vmatpush1.msra.mxu0 0.0
        %366 = vmatprep.subr.mxu0 0.0
        %367 = vmatpush1.msra.mxu0 0.0
        %368 = vmatprep.subr.mxu0 0.0
        %369 = vmatpush1.msra.mxu0 0.0
        %370 = vmatprep.subr.mxu0 0.0
        %371 = vmatpush1.msra.mxu0 0.0
        %372 = vmatprep.subr.mxu0 0.0
        %373 = vmatpush1.msra.mxu0 0.0
        %374 = vmatprep.subr.mxu0 0.0
        %375 = vmatpush1.msra.mxu0 0.0
        %376 = vmatprep.subr.mxu0 0.0
        %377 = vmatpush1.msra.mxu0 0.0
        %378 = vmatprep.subr.mxu0 0.0
        %379 = vmatpush1.msra.mxu0 0.0
        %380 = vmatprep.subr.mxu0 0.0
        %381 = vmatpush1.msra.mxu0 0.0
        %382 = vmatprep.subr.mxu0 0.0
        %383 = vmatpush1.msra.mxu0 0.0
        %384 = vmatprep.mubr.f32.mxu0 0.0
        %385 = vmatmul.mubr.f32.gmra.mrb[0].mxu0 %v318
        %v386 = vpop.f32.mrb[0].mxu0
        %v387 = vadd.f32 0.0, %v386
        %v388 = vpop.f32.mrb[0].mxu0
        %389 = vdwg.mxu0
        %v391 = vsel %vm316, %v306, 0
        %393 = vmatprep.subr.mxu0 0.0
        %394 = vmatpush1.msra.mxu0 %v308
        %395 = vmatprep.subr.mxu0 0.0
        %396 = vmatpush1.msra.mxu0 %v309
        %397 = vmatprep.subr.mxu0 0.0
        %398 = vmatpush1.msra.mxu0 %v310
        %399 = vmatprep.subr.mxu0 0.0
        %400 = vmatpush1.msra.mxu0 %v311
        %401 = vmatprep.subr.mxu0 0.0
        %402 = vmatpush1.msra.mxu0 0.0
        %403 = vmatprep.subr.mxu0 0.0
        %404 = vmatpush1.msra.mxu0 0.0
        %405 = vmatprep.subr.mxu0 0.0
        %406 = vmatpush1.msra.mxu0 0.0
        %407 = vmatprep.subr.mxu0 0.0
        %408 = vmatpush1.msra.mxu0 0.0
        %409 = vmatprep.subr.mxu0 0.0
        %410 = vmatpush1.msra.mxu0 0.0
        %411 = vmatprep.subr.mxu0 0.0
        %412 = vmatpush1.msra.mxu0 0.0
        %413 = vmatprep.subr.mxu0 0.0
        %414 = vmatpush1.msra.mxu0 0.0
        %415 = vmatprep.subr.mxu0 0.0
        %416 = vmatpush1.msra.mxu0 0.0
        %417 = vmatprep.subr.mxu0 0.0
        %418 = vmatpush1.msra.mxu0 0.0
        %419 = vmatprep.subr.mxu0 0.0
        %420 = vmatpush1.msra.mxu0 0.0
        %421 = vmatprep.subr.mxu0 0.0
        %422 = vmatpush1.msra.mxu0 0.0
        %423 = vmatprep.subr.mxu0 0.0
        %424 = vmatpush1.msra.mxu0 0.0
        %425 = vmatprep.subr.mxu0 0.0
        %426 = vmatpush1.msra.mxu0 0.0
        %427 = vmatprep.subr.mxu0 0.0
        %428 = vmatpush1.msra.mxu0 0.0
        %429 = vmatprep.subr.mxu0 0.0
        %430 = vmatpush1.msra.mxu0 0.0
        %431 = vmatprep.subr.mxu0 0.0
        %432 = vmatpush1.msra.mxu0 0.0
        %433 = vmatprep.subr.mxu0 0.0
        %434 = vmatpush1.msra.mxu0 0.0
        %435 = vmatprep.subr.mxu0 0.0
        %436 = vmatpush1.msra.mxu0 0.0
        %437 = vmatprep.subr.mxu0 0.0
        %438 = vmatpush1.msra.mxu0 0.0
        %439 = vmatprep.subr.mxu0 0.0
        %440 = vmatpush1.msra.mxu0 0.0
        %441 = vmatprep.subr.mxu0 0.0
        %442 = vmatpush1.msra.mxu0 0.0
        %443 = vmatprep.subr.mxu0 0.0
        %444 = vmatpush1.msra.mxu0 0.0
        %445 = vmatprep.subr.mxu0 0.0
        %446 = vmatpush1.msra.mxu0 0.0
        %447 = vmatprep.subr.mxu0 0.0
        %448 = vmatpush1.msra.mxu0 0.0
        %449 = vmatprep.subr.mxu0 0.0
        %450 = vmatpush1.msra.mxu0 0.0
        %451 = vmatprep.subr.mxu0 0.0
        %452 = vmatpush1.msra.mxu0 0.0
        %453 = vmatprep.subr.mxu0 0.0
        %454 = vmatpush1.msra.mxu0 0.0
        %455 = vmatprep.subr.mxu0 0.0
        %456 = vmatpush1.msra.mxu0 0.0
        %457 = vmatprep.mubr.f32.mxu0 0.0
        %458 = vmatmul.mubr.f32.gmra.mrb[0].mxu0 %v391
        %v459 = vpop.f32.mrb[0].mxu0
        %v460 = vadd.f32 %v387, %v459
        %v461 = vpop.f32.mrb[0].mxu0
        %462 = vdwg.mxu0
        %v463 = vld [vmem:[%s4] sm:$0x1]
        %v465 = vlaneseq
        %v466 = vshrl.u32 %v465, 7
        %v467 = vsub.s32 0, %v466
        %v468 = vrot.slane %v463, %v467
        %v470 = vadd.f32 %v460, %v468
        %v471 = vxor.u32 %v470, 2147483648
        %v472 = vmul.f32 %v471, 1.442695
        %v473 = vpow.pop %v472
        %v474 = vadd.f32 %v473, 1.0
        %v475 = vrcp.pop %v474
        %v476 = vmul.f32 1.0, %v475
        %v477 = vsub.f32 %v306, %v307
        %v478 = vmul.f32 %v476, %v477
        %v479 = vadd.f32 %v307, %v478
        %480 = vst.msk [vmem:[%s305] sm:$0xff] %vm316, %v479
        %s481 = sand.u32 %s149, 1
        %s482 = scalar_lea.sflag [#allocation4], %s481
        %s483 = sand.u32 %s149, 1
        %s484 = smul.addr %s483, 8
        %s485 = scalar_lea.vmem [#allocation10], %s484
        // Predicated region
        $region57: #{tpu_custom_call.1} parent=39 // pred_check
          %p486 = pneg %p159
        $region58: #{tpu_custom_call.1} parent=39 // pred_check_branch
          %488 = sbr.rel (%p486) target = $region60
        $region59: #{tpu_custom_call.1} parent=39 // pred_region
          %s490 = ssub.s32 128, 128
          %491 = vsyncadd %s482, %s490
          %s492 = smul.addr %s26, 128
          %s493 = scalar_lea.hbm %s5, %s492
          %s495 = sshll.u32 %s485, 4
          %s496 = int_to_ptr.vmem [resolvable:$true] %s495
          %498 = dma.vmem_to_hbm [thread:$0]  %s496, 128, %s493, %s482
        $region60: #{tpu_custom_call.1} parent=39 // pred_fallthru
          _
      $region40: #{tpu_custom_call.1} parent=5 // pred_fallthru
        _
      %p499 = scmp.le.s32.totalorder 2, %s21
      // Predicated region
      $region61: #{tpu_custom_call.1} parent=5 // pred_check
        %p500 = pneg %p499
      $region62: #{tpu_custom_call.1} parent=5 // pred_check_branch
        %502 = sbr.rel (%p500) target = $region64
      $region63: #{tpu_custom_call.1} parent=5 // pred_region
        %s503 = ssub.s32 %s21, 2
        // Predicated region
        $region65: #{tpu_custom_call.1} parent=63 // pred_check
          %p504 = pneg %p165
        $region66: #{tpu_custom_call.1} parent=63 // pred_check_branch
          %506 = sbr.rel (%p504) target = $region68
        $region67: #{tpu_custom_call.1} parent=63 // pred_region
          %s507 = sand.u32 %s150, 1
          %s508 = scalar_lea.sflag [#allocation4], %s507
          %s509 = sand.u32 %s150, 1
          %s510 = smul.addr %s509, 8
          %s511 = scalar_lea.vmem [#allocation10], %s510
          %512 = dma.done %s508, 128
        $region68: #{tpu_custom_call.1} parent=63 // pred_fallthru
          _
      $region64: #{tpu_custom_call.1} parent=5 // pred_fallthru
        _
    $region6: #{tpu_custom_call.1} parent=1 // loop_footer
      %s25 = sadd.s32 1, %s21
    $region7: #{tpu_custom_call.1} parent=1 // loop_footer_branch
      %20 = sbr.rel target = $region3
    $region8: #{tpu_custom_call.1} parent=1 // loop_exit
      _
    %513 = vsyncpa [#allocation3], 1
    %s514 = scalar_lea.sflag [#allocation3], 1
    %515 = vsyncpa %s514, 1
    %516 = vsyncpa [#allocation6], 1
    %s517 = scalar_lea.sflag [#allocation6], 1
    %518 = vsyncpa %s517, 1
    %519 = vsyncpa [#allocation9], 1
    %520 = vsyncpa [#allocation4], 1
    %s521 = scalar_lea.sflag [#allocation4], 1
    %522 = vsyncpa %s521, 1

</llo_original>
